<compile_context>
chip_gen: v7x
topology: tpu7x:2x2x1
jax: 0.10.0
libtpu: 0.0.40
codegen_flags: <defaults>
</compile_context>

<pallas_src>
import jax
import jax.numpy as jnp
from jax.experimental import pallas as pl
from jax.experimental.pallas import tpu as pltpu


DT = 0.05  # integrator step (static, like sim.solver_options.T)


def _round_up(n, m):
    return ((n + m - 1) // m) * m


def _affine_step_kernel_xup(x_ref, u_ref, p_ref, phit_ref, gbt_ref, gpt_ref, o_ref):
    """x_next block = x @ Phi^T + u @ (Gam B)^T + p @ (Gam P)^T."""
    acc = jnp.dot(x_ref[...], phit_ref[...], preferred_element_type=jnp.float32)
    acc = acc + jnp.dot(u_ref[...], gbt_ref[...], preferred_element_type=jnp.float32)
    acc = acc + jnp.dot(p_ref[...], gpt_ref[...], preferred_element_type=jnp.float32)
    o_ref[...] = acc.astype(o_ref.dtype)


def _affine_step_kernel_xu(x_ref, u_ref, phit_ref, gbt_ref, o_ref):
    """Two-input variant (expression without parameters p)."""
    acc = jnp.dot(x_ref[...], phit_ref[...], preferred_element_type=jnp.float32)
    acc = acc + jnp.dot(u_ref[...], gbt_ref[...], preferred_element_type=jnp.float32)
    o_ref[...] = acc.astype(o_ref.dtype)


def make_casadi_expr_forward(A, B, P=None, dt=DT, block_rows=1024,
                             stream_dtype=jnp.float32):
    """Build forward(x, u[, p]) -> x_next. All precompute happens ONCE here."""
    A = jnp.asarray(A, jnp.float32)
    B = jnp.asarray(B, jnp.float32)
    nx = A.shape[0]
    nu = B.shape[1]
    dtf = jnp.float32(dt)

    # RK4 transition matrices for the LTI system (exact collapse of k1..k4).
    dtA = dtf * A
    I = jnp.eye(nx, dtype=jnp.float32)
    A2 = dtA @ dtA
    A3 = A2 @ dtA
    A4 = A3 @ dtA
    Phi = I + dtA + A2 / 2.0 + A3 / 6.0 + A4 / 24.0          # state map
    Gam = dtf * (I + dtA / 2.0 + A2 / 6.0 + A3 / 24.0)        # drive map

    phit = jnp.asarray(Phi.T, stream_dtype)                   # (nx, nx)
    gbt = jnp.asarray((Gam @ B).T, stream_dtype)              # (nu, nx)
    have_p = P is not None
    if have_p:
        P = jnp.asarray(P, jnp.float32)
        np_dim = P.shape[1]
        gpt = jnp.asarray((Gam @ P).T, stream_dtype)          # (np, nx)
    else:
        np_dim = 0
        gpt = None

    elem = jnp.dtype(stream_dtype).itemsize
    nf = nx + nu + np_dim

    def forward(x, u, p=None):
        assert (p is not None) == have_p
        batch = x.shape[0]

        # Largest tile for DMA amortization, but >= 2 grid steps when batch
        # allows (so "parallel" shards across both TCs on v7x); rows kept a
        # multiple of 8. Last block may be partial (no whole-array padding).
        tb = max(8, min(block_rows, _round_up(-(-batch // 2), 8)))
        grid = (pl.cdiv(batch, tb),)

        def row_spec(n):
            return pl.BlockSpec((tb, n), lambda i: (i, 0))

        def w_spec(n):
            return pl.BlockSpec((n, nx), lambda i: (0, 0))    # grid-invariant

        operands = [x.astype(stream_dtype), u.astype(stream_dtype)]
        in_specs = [row_spec(nx), row_spec(nu)]
        weights = [phit, gbt]
        w_specs = [w_spec(nx), w_spec(nu)]
        kernel = _affine_step_kernel_xu
        if have_p:
            operands.append(p.astype(stream_dtype))
            in_specs.append(row_spec(np_dim))
            weights.append(gpt)
            w_specs.append(w_spec(np_dim))
            kernel = _affine_step_kernel_xup

        out_elem = jnp.dtype(x.dtype).itemsize
        cost = pl.CostEstimate(
            flops=2 * batch * nf * nx,
            transcendentals=0,
            bytes_accessed=elem * (batch * nf + nf * nx) + out_elem * batch * nx,
        )

        return pl.pallas_call(
            kernel,
            out_shape=jax.ShapeDtypeStruct((batch, nx), x.dtype),
            grid=grid,
            in_specs=in_specs + w_specs,
            out_specs=pl.BlockSpec((tb, nx), lambda i: (i, 0)),
            compiler_params=pltpu.CompilerParams(
                dimension_semantics=("parallel",),
            ),
            cost_estimate=cost,
        )(*operands, *weights)

    return jax.jit(forward)


def _reference_forward(x, u, p, A, B, P, dt=DT):
    """Pure-JAX explicit-RK4 reference (the original expression semantics)."""
    drive = u @ B.T
    if p is not None:
        drive = drive + p @ P.T

    def f(xc):
        return xc @ A.T + drive

    dtf = jnp.float32(dt)
    k1 = f(x)
    k2 = f(x + 0.5 * dtf * k1)
    k3 = f(x + 0.5 * dtf * k2)
    k4 = f(x + dtf * k3)
    return x + (dtf / 6.0) * (k1 + 2.0 * k2 + 2.0 * k3 + k4)


def _make_params(nx, nu, np_dim):
    """Deterministic, stable dynamics matrices (no checkpoint load)."""
    i = jnp.arange(nx, dtype=jnp.float32)
    j = jnp.arange(nx, dtype=jnp.float32)
    A = (-0.8 * jnp.eye(nx, dtype=jnp.float32)
         + 0.02 * (i[:, None] - j[None, :]) / nx)
    ku = jnp.arange(nu, dtype=jnp.float32)
    B = 0.1 * jnp.cos(i[:, None] * 0.3 + ku[None, :] * 0.7)
    kp = jnp.arange(np_dim, dtype=jnp.float32)
    P = 0.05 * jnp.sin(i[:, None] * 0.5 + kp[None, :] * 1.1)
    return A, B, P


if __name__ == "__main__":
    batch, nx, nu, np_dim = 8, 32, 8, 4

    key = jax.random.PRNGKey(0)
    kx, ku, kp = jax.random.split(key, 3)
    x = jax.random.normal(kx, (batch, nx), dtype=jnp.float32)
    u = jax.random.normal(ku, (batch, nu), dtype=jnp.float32)
    p = jax.random.normal(kp, (batch, np_dim), dtype=jnp.float32)

    A, B, P = _make_params(nx, nu, np_dim)

    # Three-input expression (x, u, p).
    fwd = make_casadi_expr_forward(A, B, P)
    x_next = jax.block_until_ready(fwd(x, u, p))
    ref = _reference_forward(x, u, p, A, B, P)
    assert x_next.shape == (batch, nx)
    assert jnp.allclose(x_next, ref, atol=1e-5, rtol=1e-5)

    # Two-input expression (x, u) — exercises the p=None branch.
    fwd2 = make_casadi_expr_forward(A, B, None)
    x_next2 = jax.block_until_ready(fwd2(x, u))
    ref2 = _reference_forward(x, u, None, A, B, None)
    assert x_next2.shape == (batch, nx)
    assert jnp.allclose(x_next2, ref2, atol=1e-5, rtol=1e-5)

    print("KERNEL_OK")
</pallas_src>

<mosaic_0001>
module attributes {stable_mosaic.version = 11 : i64} {
  func.func @_affine_step_kernel_xup(%arg0: i32, %arg1: memref<8x32xf32, #tpu.memory_space<vmem>>, %arg2: memref<8x8xf32, #tpu.memory_space<vmem>>, %arg3: memref<8x4xf32, #tpu.memory_space<vmem>>, %arg4: memref<32x32xf32, #tpu.memory_space<vmem>>, %arg5: memref<8x32xf32, #tpu.memory_space<vmem>>, %arg6: memref<4x32xf32, #tpu.memory_space<vmem>>, %arg7: memref<8x32xf32, #tpu.memory_space<vmem>>) attributes {dimension_semantics = [#tpu.dimension_semantics<parallel>], iteration_bounds = array<i64: 1>, scalar_prefetch = 0 : i64, scratch_operands = 0 : i64, tpu.core_type = #tpu.core_type<tc>, window_params = [{transform_indices = @transform_0, window_bounds = array<i64: 8, 32>}, {transform_indices = @transform_1, window_bounds = array<i64: 8, 8>}, {transform_indices = @transform_2, window_bounds = array<i64: 8, 4>}, {pipeline_mode = #tpu.pipeline_mode<synchronous>, transform_indices = @transform_3, window_bounds = array<i64: 32, 32>}, {pipeline_mode = #tpu.pipeline_mode<synchronous>, transform_indices = @transform_4, window_bounds = array<i64: 8, 32>}, {pipeline_mode = #tpu.pipeline_mode<synchronous>, transform_indices = @transform_5, window_bounds = array<i64: 4, 32>}, {transform_indices = @transform_6, window_bounds = array<i64: 8, 32>}]} {
    %c0 = arith.constant 0 : index
    %c0_0 = arith.constant 0 : index
    %0 = vector.load %arg1[%c0, %c0_0] : memref<8x32xf32, #tpu.memory_space<vmem>>, vector<8x32xf32>
    %c0_1 = arith.constant 0 : index
    %c0_2 = arith.constant 0 : index
    %1 = vector.load %arg4[%c0_1, %c0_2] : memref<32x32xf32, #tpu.memory_space<vmem>>, vector<32x32xf32>
    %cst = arith.constant dense<0.000000e+00> : vector<8x32xf32>
    %2 = tpu.matmul %0, %1, %cst {dimension_numbers = #tpu.dot_dimension_numbers<[1], [0], [0], [1], [0, 0, 1, 1], [], []>} : vector<8x32xf32>, vector<32x32xf32>, vector<8x32xf32> -> vector<8x32xf32>
    %c0_3 = arith.constant 0 : index
    %c0_4 = arith.constant 0 : index
    %3 = vector.load %arg2[%c0_3, %c0_4] : memref<8x8xf32, #tpu.memory_space<vmem>>, vector<8x8xf32>
    %c0_5 = arith.constant 0 : index
    %c0_6 = arith.constant 0 : index
    %4 = vector.load %arg5[%c0_5, %c0_6] : memref<8x32xf32, #tpu.memory_space<vmem>>, vector<8x32xf32>
    %cst_7 = arith.constant dense<0.000000e+00> : vector<8x32xf32>
    %5 = tpu.matmul %3, %4, %cst_7 {dimension_numbers = #tpu.dot_dimension_numbers<[1], [0], [0], [1], [0, 0, 1, 1], [], []>} : vector<8x8xf32>, vector<8x32xf32>, vector<8x32xf32> -> vector<8x32xf32>
    %6 = arith.addf %2, %5 : vector<8x32xf32>
    %c0_8 = arith.constant 0 : index
    %c0_9 = arith.constant 0 : index
    %7 = vector.load %arg3[%c0_8, %c0_9] : memref<8x4xf32, #tpu.memory_space<vmem>>, vector<8x4xf32>
    %c0_10 = arith.constant 0 : index
    %c0_11 = arith.constant 0 : index
    %8 = vector.load %arg6[%c0_10, %c0_11] : memref<4x32xf32, #tpu.memory_space<vmem>>, vector<4x32xf32>
    %cst_12 = arith.constant dense<0.000000e+00> : vector<8x32xf32>
    %9 = tpu.matmul %7, %8, %cst_12 {dimension_numbers = #tpu.dot_dimension_numbers<[1], [0], [0], [1], [0, 0, 1, 1], [], []>} : vector<8x4xf32>, vector<4x32xf32>, vector<8x32xf32> -> vector<8x32xf32>
    %10 = arith.addf %6, %9 : vector<8x32xf32>
    %c0_13 = arith.constant 0 : index
    %c0_14 = arith.constant 0 : index
    %11 = vector.load %arg7[%c0_13, %c0_14] : memref<8x32xf32, #tpu.memory_space<vmem>>, vector<8x32xf32>
    tpu.vector_store %arg7[%c0_13, %c0_14], %10 {strides = array<i32>} : memref<8x32xf32, #tpu.memory_space<vmem>>, vector<8x32xf32>,
    return
  }
  func.func @transform_0(%arg0: i32) -> (i32, i32) {
    %c0_i32 = arith.constant 0 : i32
    %c0_i32_0 = arith.constant 0 : i32
    return %arg0, %c0_i32 : i32, i32
  }
  func.func @transform_1(%arg0: i32) -> (i32, i32) {
    %c0_i32 = arith.constant 0 : i32
    %c0_i32_0 = arith.constant 0 : i32
    return %arg0, %c0_i32 : i32, i32
  }
  func.func @transform_2(%arg0: i32) -> (i32, i32) {
    %c0_i32 = arith.constant 0 : i32
    %c0_i32_0 = arith.constant 0 : i32
    return %arg0, %c0_i32 : i32, i32
  }
  func.func @transform_3(%arg0: i32) -> (i32, i32) {
    %c0_i32 = arith.constant 0 : i32
    %c0_i32_0 = arith.constant 0 : i32
    %c0_i32_1 = arith.constant 0 : i32
    return %c0_i32, %c0_i32_0 : i32, i32
  }
  func.func @transform_4(%arg0: i32) -> (i32, i32) {
    %c0_i32 = arith.constant 0 : i32
    %c0_i32_0 = arith.constant 0 : i32
    %c0_i32_1 = arith.constant 0 : i32
    return %c0_i32, %c0_i32_0 : i32, i32
  }
  func.func @transform_5(%arg0: i32) -> (i32, i32) {
    %c0_i32 = arith.constant 0 : i32
    %c0_i32_0 = arith.constant 0 : i32
    %c0_i32_1 = arith.constant 0 : i32
    return %c0_i32, %c0_i32_0 : i32, i32
  }
  func.func @transform_6(%arg0: i32) -> (i32, i32) {
    %c0_i32 = arith.constant 0 : i32
    %c0_i32_0 = arith.constant 0 : i32
    return %arg0, %c0_i32 : i32, i32
  }
}

</mosaic_0001>

<llo_original>
// kernel: forward.1
$region0: #{forward.1}
  #allocation0 [shape = 'u32[]', space=smem, size = 0x4, offset = 0x4, fixed_abs, tag = 'smem constant byte address 0x4 - core index']
  #allocation1 [shape = 'u32[144,128]{1,0:T(1,128)}', space=vmem, size = 0x12000, scoped, tag = 'internal scratch']
  %s0 = inlined_call_operand.vmem [shape: f32[8,32], index: 0, kind: input, shape index: {}]
  %s1 = inlined_call_operand.hbm [shape: f32[8,8], index: 1, kind: input, shape index: {}]
  %s2 = inlined_call_operand.vmem [shape: f32[8,4], index: 2, kind: input, shape index: {}]
  %s3 = inlined_call_operand.hbm [shape: f32[32,32], index: 3, kind: input, shape index: {}]
  %s4 = inlined_call_operand.vmem [shape: f32[8,32], index: 4, kind: input, shape index: {}]
  %s5 = inlined_call_operand.vmem [shape: f32[4,32], index: 5, kind: input, shape index: {}]
  %s6 = inlined_call_operand.hbm [shape: f32[8,32], index: 6, kind: output, shape index: {}]
  %s7 = sld [smem:[#allocation0]]
  $region42: #{forward.1} parent=0
    _
  %s9 = ssub.s32 1, %s7
  %s10 = scalar_select 0, %s9, %s7
  $region1: #{forward.1} parent=0
    #allocation2 [shape = 'u8[4096]{0}', space=vmem, size = 0x1000, scoped, tag = 'input window, operand 1, single buffered']
    #allocation3 [shape = 's32[1]{0}', space=sflag, size = 0x4, scoped, tag = 'scoped memory for forward.1']
    #allocation4 [shape = 's32[1]{0}', space=sflag, size = 0x4, scoped, tag = 'scoped memory for forward.1']
    #allocation5 [shape = 'u8[16384]{0}', space=vmem, size = 0x4000, scoped, tag = 'input window, operand 3, single buffered']
    #allocation6 [shape = 's32[1]{0}', space=sflag, size = 0x4, scoped, tag = 'scoped memory for forward.1']
    #allocation7 [shape = 'u8[4096]{0}', space=vmem, size = 0x1000, scoped, tag = 'output window, operand 0, single buffered']
    %11 = vsyncpa [#allocation3], 0
    %12 = vsyncpa [#allocation6], 0
    %13 = vsyncpa [#allocation4], 0
    // Predicated region
    $region2: #{forward.1} parent=1 // pred_check
      _
    $region3: #{forward.1} parent=1 // pred_check_branch
      %15 = sbr.rel (0) target = $region5
    $region4: #{forward.1} parent=1 // pred_region
      _
    $region5: #{forward.1} parent=1 // pred_fallthru
      _
    // Predicated region
    $region6: #{forward.1} parent=1 // pred_check
      _
    $region7: #{forward.1} parent=1 // pred_check_branch
      %17 = sbr.rel (0) target = $region9
    $region8: #{forward.1} parent=1 // pred_region
      %s19 = ssub.s32 128, 128
      %20 = vsyncadd [#allocation3], %s19
      %s22 = sshll.u32 [#allocation2], 4
      %s23 = int_to_ptr.vmem [resolvable:$true] %s22
      %25 = dma.hbm_to_vmem [thread:$0]  %s1, 128, %s23, [#allocation3]
    $region9: #{forward.1} parent=1 // pred_fallthru
      _
    // Predicated region
    $region10: #{forward.1} parent=1 // pred_check
      _
    $region11: #{forward.1} parent=1 // pred_check_branch
      %27 = sbr.rel (0) target = $region13
    $region12: #{forward.1} parent=1 // pred_region
      _
    $region13: #{forward.1} parent=1 // pred_fallthru
      _
    // Predicated region
    $region14: #{forward.1} parent=1 // pred_check
      _
    $region15: #{forward.1} parent=1 // pred_check_branch
      %29 = sbr.rel (0) target = $region17
    $region16: #{forward.1} parent=1 // pred_region
      %s31 = ssub.s32 512, 512
      %32 = vsyncadd [#allocation6], %s31
      %s33 = sshll.u32 [#allocation5], 4
      %s34 = int_to_ptr.vmem [resolvable:$true] %s33
      %39 = dma.hbm_to_vmem [thread:$0]  %s3, 512, %s34, [#allocation6], 128, 128, 8
    $region17: #{forward.1} parent=1 // pred_fallthru
      _
    // Predicated region
    $region18: #{forward.1} parent=1 // pred_check
      _
    $region19: #{forward.1} parent=1 // pred_check_branch
      %41 = sbr.rel (0) target = $region21
    $region20: #{forward.1} parent=1 // pred_region
      _
    $region21: #{forward.1} parent=1 // pred_fallthru
      _
    // Predicated region
    $region22: #{forward.1} parent=1 // pred_check
      _
    $region23: #{forward.1} parent=1 // pred_check_branch
      %43 = sbr.rel (0) target = $region25
    $region24: #{forward.1} parent=1 // pred_region
      _
    $region25: #{forward.1} parent=1 // pred_fallthru
      _
    // Predicated region
    $region26: #{forward.1} parent=1 // pred_check
      _
    $region27: #{forward.1} parent=1 // pred_check_branch
      %45 = sbr.rel (0) target = $region29
    $region28: #{forward.1} parent=1 // pred_region
      %46 = dma.done [#allocation3], 128
    $region29: #{forward.1} parent=1 // pred_fallthru
      _
    // Predicated region
    $region30: #{forward.1} parent=1 // pred_check
      _
    $region31: #{forward.1} parent=1 // pred_check_branch
      %48 = sbr.rel (0) target = $region33
    $region32: #{forward.1} parent=1 // pred_region
      %49 = dma.done [#allocation6], 512
    $region33: #{forward.1} parent=1 // pred_fallthru
      _
    %v50 = vld [vmem:[%s0] sm:$0xff]
    %v51 = vld [vmem:[#allocation5] sm:$0xff]
    %v52 = vld [vmem:[#allocation5 + $0x8] sm:$0xff]
    %v53 = vld [vmem:[#allocation5 + $0x10] sm:$0xff]
    %v54 = vld [vmem:[#allocation5 + $0x18] sm:$0xff]
    %v55 = vld [vmem:[#allocation2] sm:$0xff]
    %v56 = vld [vmem:[%s4] sm:$0xff]
    %vm57 = vcmask 64512
    %v59 = vsel %vm57, %v55, 0
    %61 = vmatprep.subr.mxu0 0.0
    %62 = vmatpush1.msra.mxu0 %v56
    %63 = vmatprep.subr.mxu0 0.0
    %64 = vmatpush1.msra.mxu0 0.0
    %65 = vmatprep.subr.mxu0 0.0
    %66 = vmatpush1.msra.mxu0 0.0
    %67 = vmatprep.subr.mxu0 0.0
    %68 = vmatpush1.msra.mxu0 0.0
    %69 = vmatprep.subr.mxu0 0.0
    %70 = vmatpush1.msra.mxu0 0.0
    %71 = vmatprep.subr.mxu0 0.0
    %72 = vmatpush1.msra.mxu0 0.0
    %73 = vmatprep.subr.mxu0 0.0
    %74 = vmatpush1.msra.mxu0 0.0
    %75 = vmatprep.subr.mxu0 0.0
    %76 = vmatpush1.msra.mxu0 0.0
    %77 = vmatprep.subr.mxu0 0.0
    %78 = vmatpush1.msra.mxu0 0.0
    %79 = vmatprep.subr.mxu0 0.0
    %80 = vmatpush1.msra.mxu0 0.0
    %81 = vmatprep.subr.mxu0 0.0
    %82 = vmatpush1.msra.mxu0 0.0
    %83 = vmatprep.subr.mxu0 0.0
    %84 = vmatpush1.msra.mxu0 0.0
    %85 = vmatprep.subr.mxu0 0.0
    %86 = vmatpush1.msra.mxu0 0.0
    %87 = vmatprep.subr.mxu0 0.0
    %88 = vmatpush1.msra.mxu0 0.0
    %89 = vmatprep.subr.mxu0 0.0
    %90 = vmatpush1.msra.mxu0 0.0
    %91 = vmatprep.subr.mxu0 0.0
    %92 = vmatpush1.msra.mxu0 0.0
    %93 = vmatprep.subr.mxu0 0.0
    %94 = vmatpush1.msra.mxu0 0.0
    %95 = vmatprep.subr.mxu0 0.0
    %96 = vmatpush1.msra.mxu0 0.0
    %97 = vmatprep.subr.mxu0 0.0
    %98 = vmatpush1.msra.mxu0 0.0
    %99 = vmatprep.subr.mxu0 0.0
    %100 = vmatpush1.msra.mxu0 0.0
    %101 = vmatprep.subr.mxu0 0.0
    %102 = vmatpush1.msra.mxu0 0.0
    %103 = vmatprep.subr.mxu0 0.0
    %104 = vmatpush1.msra.mxu0 0.0
    %105 = vmatprep.subr.mxu0 0.0
    %106 = vmatpush1.msra.mxu0 0.0
    %107 = vmatprep.subr.mxu0 0.0
    %108 = vmatpush1.msra.mxu0 0.0
    %109 = vmatprep.subr.mxu0 0.0
    %110 = vmatpush1.msra.mxu0 0.0
    %111 = vmatprep.subr.mxu0 0.0
    %112 = vmatpush1.msra.mxu0 0.0
    %113 = vmatprep.subr.mxu0 0.0
    %114 = vmatpush1.msra.mxu0 0.0
    %115 = vmatprep.subr.mxu0 0.0
    %116 = vmatpush1.msra.mxu0 0.0
    %117 = vmatprep.subr.mxu0 0.0
    %118 = vmatpush1.msra.mxu0 0.0
    %119 = vmatprep.subr.mxu0 0.0
    %120 = vmatpush1.msra.mxu0 0.0
    %121 = vmatprep.subr.mxu0 0.0
    %122 = vmatpush1.msra.mxu0 0.0
    %123 = vmatprep.subr.mxu0 0.0
    %124 = vmatpush1.msra.mxu0 0.0
    %125 = vmatprep.mubr.f32.mxu0 0.0
    %126 = vmatmul.mubr.f32.gmra.mrb[0].mxu0 %v59
    %v127 = vpop.f32.mrb[0].mxu0
    %v128 = vadd.f32 0.0, %v127
    %v129 = vpop.f32.mrb[0].mxu0
    %130 = vdwg.mxu0
    %vm131 = vcmask 261120
    %v133 = vsel %vm131, %v50, 0
    %135 = vmatprep.subr.mxu0 0.0
    %136 = vmatpush1.msra.mxu0 %v51
    %137 = vmatprep.subr.mxu0 0.0
    %138 = vmatpush1.msra.mxu0 %v52
    %139 = vmatprep.subr.mxu0 0.0
    %140 = vmatpush1.msra.mxu0 %v53
    %141 = vmatprep.subr.mxu0 0.0
    %142 = vmatpush1.msra.mxu0 %v54
    %143 = vmatprep.subr.mxu0 0.0
    %144 = vmatpush1.msra.mxu0 0.0
    %145 = vmatprep.subr.mxu0 0.0
    %146 = vmatpush1.msra.mxu0 0.0
    %147 = vmatprep.subr.mxu0 0.0
    %148 = vmatpush1.msra.mxu0 0.0
    %149 = vmatprep.subr.mxu0 0.0
    %150 = vmatpush1.msra.mxu0 0.0
    %151 = vmatprep.subr.mxu0 0.0
    %152 = vmatpush1.msra.mxu0 0.0
    %153 = vmatprep.subr.mxu0 0.0
    %154 = vmatpush1.msra.mxu0 0.0
    %155 = vmatprep.subr.mxu0 0.0
    %156 = vmatpush1.msra.mxu0 0.0
    %157 = vmatprep.subr.mxu0 0.0
    %158 = vmatpush1.msra.mxu0 0.0
    %159 = vmatprep.subr.mxu0 0.0
    %160 = vmatpush1.msra.mxu0 0.0
    %161 = vmatprep.subr.mxu0 0.0
    %162 = vmatpush1.msra.mxu0 0.0
    %163 = vmatprep.subr.mxu0 0.0
    %164 = vmatpush1.msra.mxu0 0.0
    %165 = vmatprep.subr.mxu0 0.0
    %166 = vmatpush1.msra.mxu0 0.0
    %167 = vmatprep.subr.mxu0 0.0
    %168 = vmatpush1.msra.mxu0 0.0
    %169 = vmatprep.subr.mxu0 0.0
    %170 = vmatpush1.msra.mxu0 0.0
    %171 = vmatprep.subr.mxu0 0.0
    %172 = vmatpush1.msra.mxu0 0.0
    %173 = vmatprep.subr.mxu0 0.0
    %174 = vmatpush1.msra.mxu0 0.0
    %175 = vmatprep.subr.mxu0 0.0
    %176 = vmatpush1.msra.mxu0 0.0
    %177 = vmatprep.subr.mxu0 0.0
    %178 = vmatpush1.msra.mxu0 0.0
    %179 = vmatprep.subr.mxu0 0.0
    %180 = vmatpush1.msra.mxu0 0.0
    %181 = vmatprep.subr.mxu0 0.0
    %182 = vmatpush1.msra.mxu0 0.0
    %183 = vmatprep.subr.mxu0 0.0
    %184 = vmatpush1.msra.mxu0 0.0
    %185 = vmatprep.subr.mxu0 0.0
    %186 = vmatpush1.msra.mxu0 0.0
    %187 = vmatprep.subr.mxu0 0.0
    %188 = vmatpush1.msra.mxu0 0.0
    %189 = vmatprep.subr.mxu0 0.0
    %190 = vmatpush1.msra.mxu0 0.0
    %191 = vmatprep.subr.mxu0 0.0
    %192 = vmatpush1.msra.mxu0 0.0
    %193 = vmatprep.subr.mxu0 0.0
    %194 = vmatpush1.msra.mxu0 0.0
    %195 = vmatprep.subr.mxu0 0.0
    %196 = vmatpush1.msra.mxu0 0.0
    %197 = vmatprep.subr.mxu0 0.0
    %198 = vmatpush1.msra.mxu0 0.0
    %199 = vmatprep.mubr.f32.mxu0 0.0
    %200 = vmatmul.mubr.f32.gmra.mrb[0].mxu0 %v133
    %v201 = vpop.f32.mrb[0].mxu0
    %v202 = vadd.f32 %v128, %v201
    %v203 = vpop.f32.mrb[0].mxu0
    %204 = vdwg.mxu0
    %v205 = vld [vmem:[%s2] sm:$0xff]
    %v206 = vld [vmem:[%s5] sm:$0xf]
    %vm207 = vcmask 31744
    %v209 = vsel %vm207, %v205, 0
    %vm211 = vcmask 1043456
    %v213 = vsel %vm211, %v206, 0
    %215 = vmatprep.subr.mxu0 0.0
    %216 = vmatpush1.msra.mxu0 %v213
    %217 = vmatprep.subr.mxu0 0.0
    %218 = vmatpush1.msra.mxu0 0.0
    %219 = vmatprep.subr.mxu0 0.0
    %220 = vmatpush1.msra.mxu0 0.0
    %221 = vmatprep.subr.mxu0 0.0
    %222 = vmatpush1.msra.mxu0 0.0
    %223 = vmatprep.subr.mxu0 0.0
    %224 = vmatpush1.msra.mxu0 0.0
    %225 = vmatprep.subr.mxu0 0.0
    %226 = vmatpush1.msra.mxu0 0.0
    %227 = vmatprep.subr.mxu0 0.0
    %228 = vmatpush1.msra.mxu0 0.0
    %229 = vmatprep.subr.mxu0 0.0
    %230 = vmatpush1.msra.mxu0 0.0
    %231 = vmatprep.subr.mxu0 0.0
    %232 = vmatpush1.msra.mxu0 0.0
    %233 = vmatprep.subr.mxu0 0.0
    %234 = vmatpush1.msra.mxu0 0.0
    %235 = vmatprep.subr.mxu0 0.0
    %236 = vmatpush1.msra.mxu0 0.0
    %237 = vmatprep.subr.mxu0 0.0
    %238 = vmatpush1.msra.mxu0 0.0
    %239 = vmatprep.subr.mxu0 0.0
    %240 = vmatpush1.msra.mxu0 0.0
    %241 = vmatprep.subr.mxu0 0.0
    %242 = vmatpush1.msra.mxu0 0.0
    %243 = vmatprep.subr.mxu0 0.0
    %244 = vmatpush1.msra.mxu0 0.0
    %245 = vmatprep.subr.mxu0 0.0
    %246 = vmatpush1.msra.mxu0 0.0
    %247 = vmatprep.subr.mxu0 0.0
    %248 = vmatpush1.msra.mxu0 0.0
    %249 = vmatprep.subr.mxu0 0.0
    %250 = vmatpush1.msra.mxu0 0.0
    %251 = vmatprep.subr.mxu0 0.0
    %252 = vmatpush1.msra.mxu0 0.0
    %253 = vmatprep.subr.mxu0 0.0
    %254 = vmatpush1.msra.mxu0 0.0
    %255 = vmatprep.subr.mxu0 0.0
    %256 = vmatpush1.msra.mxu0 0.0
    %257 = vmatprep.subr.mxu0 0.0
    %258 = vmatpush1.msra.mxu0 0.0
    %259 = vmatprep.subr.mxu0 0.0
    %260 = vmatpush1.msra.mxu0 0.0
    %261 = vmatprep.subr.mxu0 0.0
    %262 = vmatpush1.msra.mxu0 0.0
    %263 = vmatprep.subr.mxu0 0.0
    %264 = vmatpush1.msra.mxu0 0.0
    %265 = vmatprep.subr.mxu0 0.0
    %266 = vmatpush1.msra.mxu0 0.0
    %267 = vmatprep.subr.mxu0 0.0
    %268 = vmatpush1.msra.mxu0 0.0
    %269 = vmatprep.subr.mxu0 0.0
    %270 = vmatpush1.msra.mxu0 0.0
    %271 = vmatprep.subr.mxu0 0.0
    %272 = vmatpush1.msra.mxu0 0.0
    %273 = vmatprep.subr.mxu0 0.0
    %274 = vmatpush1.msra.mxu0 0.0
    %275 = vmatprep.subr.mxu0 0.0
    %276 = vmatpush1.msra.mxu0 0.0
    %277 = vmatprep.subr.mxu0 0.0
    %278 = vmatpush1.msra.mxu0 0.0
    %279 = vmatprep.mubr.f32.mxu0 0.0
    %280 = vmatmul.mubr.f32.gmra.mrb[0].mxu0 %v209
    %v281 = vpop.f32.mrb[0].mxu0
    %v282 = vadd.f32 0.0, %v281
    %v283 = vpop.f32.mrb[0].mxu0
    %284 = vdwg.mxu0
    %v285 = vadd.f32 %v202, %v282
    %286 = vst.msk [vmem:[#allocation7] sm:$0xff] %vm131, %v285
    // Predicated region
    $region34: #{forward.1} parent=1 // pred_check
      _
    $region35: #{forward.1} parent=1 // pred_check_branch
      %288 = sbr.rel (0) target = $region37
    $region36: #{forward.1} parent=1 // pred_region
      %s290 = ssub.s32 128, 128
      %291 = vsyncadd [#allocation4], %s290
      %s293 = sshll.u32 [#allocation7], 4
      %s294 = int_to_ptr.vmem [resolvable:$true] %s293
      %296 = dma.vmem_to_hbm [thread:$0]  %s294, 128, %s6, [#allocation4]
    $region37: #{forward.1} parent=1 // pred_fallthru
      _
    // Predicated region
    $region38: #{forward.1} parent=1 // pred_check
      _
    $region39: #{forward.1} parent=1 // pred_check_branch
      %298 = sbr.rel (0) target = $region41
    $region40: #{forward.1} parent=1 // pred_region
      %299 = dma.done [#allocation4], 128
    $region41: #{forward.1} parent=1 // pred_fallthru
      _
    %300 = vsyncpa [#allocation3], 1
    %301 = vsyncpa [#allocation6], 1
    %302 = vsyncpa [#allocation4], 1

</llo_original>
